<compile_context>
chip_gen: v5e
topology: v5e:2x2
jax: 0.10.0
libtpu: 0.0.40
codegen_flags: <defaults>
</compile_context>

<pallas_src>
import functools

import jax
import jax.numpy as jnp
from jax.experimental import pallas as pl
from jax.experimental.pallas import tpu as pltpu


_EPS = 1e-5
# 3x3 taps in (dy, dx) row-major order == PyTorch (kh, kw) weight order.
_TAPS = tuple((dy, dx) for dy in (-1, 0, 1) for dx in (-1, 0, 1))


# ----------------------------------------------------------------------------
# In-kernel value helpers (operate on loaded VMEM values)
# ----------------------------------------------------------------------------
def _bn(x, gamma, beta, relu):
    """Training-mode BatchNorm over the pixel (lane) axis, one-pass stats."""
    m = x.shape[-1]
    inv_m = 1.0 / m
    s1 = jnp.sum(x, axis=-1, keepdims=True)
    s2 = jnp.sum(x * x, axis=-1, keepdims=True)
    mean = s1 * inv_m
    var = s2 * inv_m - mean * mean          # biased batch variance
    scale = gamma * jax.lax.rsqrt(var + _EPS)
    y = (x - mean) * scale + beta
    return jnp.maximum(y, 0.0) if relu else y


def _csp(x, w12, w3):
    """CSP block: cat(conv1, conv2) folded into one matmul, then conv3."""
    h = jnp.dot(w12, x, preferred_element_type=jnp.float32)
    return jnp.dot(w3, h, preferred_element_type=jnp.float32)


def _border_masks(hh, ww, height, width):
    """Per-direction (1, M) float border masks; None means 'always valid'."""
    f32 = lambda b: b.astype(jnp.float32)
    row = {-1: f32(hh >= 1), 0: None,
           1: None if height is None else f32(hh < height - 1)}
    col = {-1: f32(ww >= 1), 0: None,
           1: None if width is None else f32(ww < width - 1)}
    return row, col


def _masked(t, rm, cm):
    if rm is None and cm is None:
        return t
    m = rm if cm is None else (cm if rm is None else rm * cm)
    return t * m


def _dw3x3_s1(x, dww, hh, ww, height, width):
    """Depthwise 3x3, stride 1, pad 1, on a (C, N*H*W) lane-dense slab.

    Tap (dy, dx) of output pixel m is input pixel m + dy*W + dx -> realized as
    a lane roll of the whole slab plus a per-pixel image-border mask built from
    the (row, col) coordinate rows.
    """
    _, m = x.shape
    row, col = _border_masks(hh, ww, height, width)
    acc = None
    for k, (dy, dx) in enumerate(_TAPS):
        off = dy * width + dx
        t = pltpu.roll(x, shift=(-off) % m, axis=1) if off else x
        term = dww[:, k:k + 1] * _masked(t, row[dy], col[dx])
        acc = term if acc is None else acc + term
    return acc


def _dw3x3_s2(x, dww, hh, ww, width_out):
    """Depthwise 3x3, stride 2, pad 1, on a parity-packed (C, 4*Mo) slab.

    The wrapper packs the input as 4 parity slabs [(row%2)*2 + col%2], each of
    Mo = N*Ho*Wo pixels; every tap of the strided conv is then a read of one
    slab, rolled by at most one output row/col, plus a border mask (only the
    first output row/col need masking for even H, W).
    """
    _, m = x.shape
    mo = m // 4
    row, col = _border_masks(hh, ww, None, None)
    acc = None
    for k, (dy, dx) in enumerate(_TAPS):
        p, sh = (1, -1) if dy == -1 else (dy, 0)
        q, sw = (1, -1) if dx == -1 else (dx, 0)
        s = 2 * p + q
        slab = x[:, s * mo:(s + 1) * mo]
        off = sh * width_out + sw
        t = pltpu.roll(slab, shift=(-off) % mo, axis=1) if off else slab
        term = dww[:, k:k + 1] * _masked(t, row[dy], col[dx])
        acc = term if acc is None else acc + term
    return acc


# ----------------------------------------------------------------------------
# Fused unit kernels (one pallas_call per forward)
# ----------------------------------------------------------------------------
def _unit_s1_kernel(x2_ref, coord_ref,
                    w12a_ref, w3a_ref, ga_ref, ba_ref,
                    dww_ref, gd_ref, bd_ref,
                    w12b_ref, w3b_ref, gb_ref, bb_ref,
                    o_ref, *, height, width):
    x2 = x2_ref[...]
    coords = coord_ref[...]
    hh, ww = coords[0:1, :], coords[1:2, :]
    # branch2: CSP -> BN+ReLU -> dw3x3(s1) -> BN -> CSP -> BN+ReLU
    h = _bn(_csp(x2, w12a_ref[...], w3a_ref[...]), ga_ref[...], ba_ref[...],
            relu=True)
    d = _bn(_dw3x3_s1(h, dww_ref[...], hh, ww, height, width),
            gd_ref[...], bd_ref[...], relu=False)
    y = _bn(_csp(d, w12b_ref[...], w3b_ref[...]), gb_ref[...], bb_ref[...],
            relu=True)
    o_ref[...] = y.astype(o_ref.dtype)


def _unit_s2_kernel(x_ref, coord_ref,
                    dww1_ref, g10_ref, b10_ref, w121_ref, w31_ref, g11_ref, b11_ref,
                    w12a_ref, w3a_ref, ga_ref, ba_ref,
                    dww2_ref, gd_ref, bd_ref,
                    w12b_ref, w3b_ref, gb_ref, bb_ref,
                    o_ref, *, width_out, bf):
    x = x_ref[...]                         # parity-packed (inp, 4*Mo), read once
    coords = coord_ref[...]
    hh, ww = coords[0:1, :], coords[1:2, :]
    # branch1: dw3x3(s2) -> BN -> CSP -> BN+ReLU
    d1 = _bn(_dw3x3_s2(x, dww1_ref[...], hh, ww, width_out),
             g10_ref[...], b10_ref[...], relu=False)
    y1 = _bn(_csp(d1, w121_ref[...], w31_ref[...]), g11_ref[...], b11_ref[...],
             relu=True)
    # branch2: CSP -> BN+ReLU -> dw3x3(s2) -> BN -> CSP -> BN+ReLU
    h = _bn(_csp(x, w12a_ref[...], w3a_ref[...]), ga_ref[...], ba_ref[...],
            relu=True)
    d2 = _bn(_dw3x3_s2(h, dww2_ref[...], hh, ww, width_out),
             gd_ref[...], bd_ref[...], relu=False)
    y2 = _bn(_csp(d2, w12b_ref[...], w3b_ref[...]), gb_ref[...], bb_ref[...],
             relu=True)
    o_ref[:bf, :] = y1.astype(o_ref.dtype)
    o_ref[bf:, :] = y2.astype(o_ref.dtype)


# ----------------------------------------------------------------------------
# pallas_call wrappers (whole arrays in VMEM; activations are a few 100 KB)
# ----------------------------------------------------------------------------
def _unit_s1_call(p2, x2, coords, *, height, width):
    bf, m = p2["csp_a"]["w3"].shape[0], x2.shape[1]
    kernel = functools.partial(_unit_s1_kernel, height=height, width=width)
    return pl.pallas_call(
        kernel,
        out_shape=jax.ShapeDtypeStruct((bf, m), jnp.float32),
    )(x2, coords,
      p2["csp_a"]["w12"], p2["csp_a"]["w3"], p2["bn_a"]["gamma"], p2["bn_a"]["beta"],
      p2["dw_w"], p2["bn_dw"]["gamma"], p2["bn_dw"]["beta"],
      p2["csp_b"]["w12"], p2["csp_b"]["w3"], p2["bn_b"]["gamma"], p2["bn_b"]["beta"])


def _unit_s2_call(params, xp, coords, *, width_out):
    p1, p2 = params["branch1"], params["branch2"]
    bf = p2["csp_b"]["w3"].shape[0]
    mo = xp.shape[1] // 4
    kernel = functools.partial(_unit_s2_kernel, width_out=width_out, bf=bf)
    return pl.pallas_call(
        kernel,
        out_shape=jax.ShapeDtypeStruct((2 * bf, mo), jnp.float32),
    )(xp, coords,
      p1["dw_w"], p1["bn0"]["gamma"], p1["bn0"]["beta"],
      p1["csp"]["w12"], p1["csp"]["w3"], p1["bn1"]["gamma"], p1["bn1"]["beta"],
      p2["csp_a"]["w12"], p2["csp_a"]["w3"], p2["bn_a"]["gamma"], p2["bn_a"]["beta"],
      p2["dw_w"], p2["bn_dw"]["gamma"], p2["bn_dw"]["beta"],
      p2["csp_b"]["w12"], p2["csp_b"]["w3"], p2["bn_b"]["gamma"], p2["bn_b"]["beta"])


# ----------------------------------------------------------------------------
# Layout / coordinate glue (pure layout permutations, stay in plain XLA)
# ----------------------------------------------------------------------------
def _pixel_coords(n, h, w):
    """(2, N*H*W) int32 slab: row 0 = pixel row, row 1 = pixel col."""
    m = jnp.arange(n * h * w, dtype=jnp.int32)
    hh = (m // w) % h
    ww = m % w
    return jnp.stack([hh, ww])


def _parity_pack(xc):
    """(C, N, H, W) -> (C, 4*N*Ho*Wo) with slabs ordered (row%2)*2 + col%2."""
    c, n, h, w = xc.shape
    ho, wo = h // 2, w // 2
    slabs = [xc[:, :, p::2, q::2].reshape(c, n * ho * wo)
             for p in (0, 1) for q in (0, 1)]
    return jnp.concatenate(slabs, axis=1), ho, wo


def _channel_shuffle(x_cm, groups=2):
    c, m = x_cm.shape
    return x_cm.reshape(groups, c // groups, m).transpose(1, 0, 2).reshape(c, m)


# ----------------------------------------------------------------------------
# Parameters (synthetic, deterministic; conv biases omitted — cancelled by BN)
# ----------------------------------------------------------------------------
def _conv1x1_w(key, cin, cout):
    return jax.random.normal(key, (cout, cin), jnp.float32) * 0.1


def _csp_params(key, cin, cout):
    k1, k2, k3 = jax.random.split(key, 3)
    w12 = jnp.concatenate([_conv1x1_w(k1, cin, cout // 2),
                           _conv1x1_w(k2, cin, cout // 2)], axis=0)
    return {"w12": w12, "w3": _conv1x1_w(k3, cout, cout)}


def _dw_weight(key, c):
    # (C, 9): depthwise 3x3 kernel, taps in row-major (kh, kw) order.
    return jax.random.normal(key, (c, 9), jnp.float32) * 0.1


def _bn_p(c):
    return {"gamma": jnp.ones((c, 1), jnp.float32),
            "beta": jnp.zeros((c, 1), jnp.float32)}


def init_cspshufflenetv2(key, inp, oup, stride):
    bf = oup // 2
    assert stride != 1 or inp == (bf << 1)
    ks = jax.random.split(key, 5)
    params = {"stride": stride, "inp": inp, "oup": oup}
    if stride == 2:
        params["branch1"] = {
            "dw_w": _dw_weight(ks[0], inp),
            "bn0": _bn_p(inp),
            "csp": _csp_params(ks[1], inp, bf),
            "bn1": _bn_p(bf),
        }
    b2_in = inp if stride == 2 else bf
    params["branch2"] = {
        "csp_a": _csp_params(ks[2], b2_in, bf),
        "bn_a": _bn_p(bf),
        "dw_w": _dw_weight(ks[3], bf),
        "bn_dw": _bn_p(bf),
        "csp_b": _csp_params(ks[4], bf, bf),
        "bn_b": _bn_p(bf),
    }
    return params


# ----------------------------------------------------------------------------
# Forward (NCHW in, NCHW out)
# ----------------------------------------------------------------------------
def cspshufflenetv2_forward(params, x_nchw):
    stride = params["stride"]
    n, c, h, w = x_nchw.shape
    xc = jnp.transpose(x_nchw, (1, 0, 2, 3))      # (C, N, H, W) channels-major

    if stride == 1:
        bf = c // 2
        m = n * h * w
        x1 = xc[:bf].reshape(bf, m)
        x2 = xc[bf:].reshape(bf, m)
        coords = _pixel_coords(n, h, w)
        y2 = _unit_s1_call(params["branch2"], x2, coords, height=h, width=w)
        out = jnp.concatenate([x1, y2], axis=0)
        ho, wo = h, w
    else:
        # TODO(synk): odd spatial dims with stride=2 not supported by the parity repack.
        assert h % 2 == 0 and w % 2 == 0
        xp, ho, wo = _parity_pack(xc)
        coords = _pixel_coords(n, ho, wo)
        out = _unit_s2_call(params, xp, coords, width_out=wo)   # cat(y1, y2) in-kernel

    out = _channel_shuffle(out, 2)                # groups=2 shuffle on sublane axis
    c_out = out.shape[0]
    return out.reshape(c_out, n, ho, wo).transpose(1, 0, 2, 3)   # back to NCHW


# ----------------------------------------------------------------------------
if __name__ == "__main__":
    key = jax.random.PRNGKey(0)
    kx, kp1, kp2 = jax.random.split(key, 3)

    N, C, H, W = 2, 16, 16, 16
    x = jax.random.normal(kx, (N, C, H, W), jnp.float32)   # PyTorch-style NCHW

    # stride=1 unit: inp == oup == 2 * branch_features
    p1 = init_cspshufflenetv2(kp1, inp=C, oup=C, stride=1)
    fwd1 = jax.jit(lambda xx: cspshufflenetv2_forward(p1, xx))
    out1 = jax.block_until_ready(fwd1(x))
    assert out1.shape == (N, C, H, W)
    assert bool(jnp.all(jnp.isfinite(out1)))

    # stride=2 unit: halves spatial, doubles channels
    p2 = init_cspshufflenetv2(kp2, inp=C, oup=2 * C, stride=2)
    fwd2 = jax.jit(lambda xx: cspshufflenetv2_forward(p2, xx))
    out2 = jax.block_until_ready(fwd2(x))
    assert out2.shape == (N, 2 * C, H // 2, W // 2)
    assert bool(jnp.all(jnp.isfinite(out2)))

    print("KERNEL_OK")
</pallas_src>

<mosaic_0001>
module attributes {stable_mosaic.version = 11 : i64} {
  func.func @_unit_s1_kernel(%arg0: memref<8x512xf32, #tpu.memory_space<vmem>>, %arg1: memref<2x512xi32, #tpu.memory_space<vmem>>, %arg2: memref<8x8xf32, #tpu.memory_space<vmem>>, %arg3: memref<8x8xf32, #tpu.memory_space<vmem>>, %arg4: memref<8x1xf32, #tpu.memory_space<vmem>>, %arg5: memref<8x1xf32, #tpu.memory_space<vmem>>, %arg6: memref<8x9xf32, #tpu.memory_space<vmem>>, %arg7: memref<8x1xf32, #tpu.memory_space<vmem>>, %arg8: memref<8x1xf32, #tpu.memory_space<vmem>>, %arg9: memref<8x8xf32, #tpu.memory_space<vmem>>, %arg10: memref<8x8xf32, #tpu.memory_space<vmem>>, %arg11: memref<8x1xf32, #tpu.memory_space<vmem>>, %arg12: memref<8x1xf32, #tpu.memory_space<vmem>>, %arg13: memref<8x512xf32, #tpu.memory_space<vmem>>) attributes {dimension_semantics = [], scalar_prefetch = 0 : i64, scratch_operands = 0 : i64, tpu.core_type = #tpu.core_type<tc>} {
    %c0 = arith.constant 0 : index
    %c0_0 = arith.constant 0 : index
    %0 = vector.load %arg0[%c0, %c0_0] : memref<8x512xf32, #tpu.memory_space<vmem>>, vector<8x512xf32>
    %c0_1 = arith.constant 0 : index
    %c0_2 = arith.constant 0 : index
    %1 = vector.load %arg1[%c0_1, %c0_2] : memref<2x512xi32, #tpu.memory_space<vmem>>, vector<2x512xi32>
    %2 = vector.extract_strided_slice %1 {offsets = [0, 0], sizes = [1, 512], strides = [1, 1]} : vector<2x512xi32> to vector<1x512xi32>
    %3 = vector.extract_strided_slice %1 {offsets = [1, 0], sizes = [1, 512], strides = [1, 1]} : vector<2x512xi32> to vector<1x512xi32>
    %c0_3 = arith.constant 0 : index
    %c0_4 = arith.constant 0 : index
    %4 = vector.load %arg2[%c0_3, %c0_4] : memref<8x8xf32, #tpu.memory_space<vmem>>, vector<8x8xf32>
    %c0_5 = arith.constant 0 : index
    %c0_6 = arith.constant 0 : index
    %5 = vector.load %arg3[%c0_5, %c0_6] : memref<8x8xf32, #tpu.memory_space<vmem>>, vector<8x8xf32>
    %cst = arith.constant dense<0.000000e+00> : vector<8x512xf32>
    %6 = tpu.matmul %4, %0, %cst {dimension_numbers = #tpu.dot_dimension_numbers<[1], [0], [0], [1], [0, 0, 1, 1], [], []>} : vector<8x8xf32>, vector<8x512xf32>, vector<8x512xf32> -> vector<8x512xf32>
    %cst_7 = arith.constant dense<0.000000e+00> : vector<8x512xf32>
    %7 = tpu.matmul %5, %6, %cst_7 {dimension_numbers = #tpu.dot_dimension_numbers<[1], [0], [0], [1], [0, 0, 1, 1], [], []>} : vector<8x8xf32>, vector<8x512xf32>, vector<8x512xf32> -> vector<8x512xf32>
    %c0_8 = arith.constant 0 : index
    %c0_9 = arith.constant 0 : index
    %8 = vector.load %arg4[%c0_8, %c0_9] : memref<8x1xf32, #tpu.memory_space<vmem>>, vector<8x1xf32>
    %c0_10 = arith.constant 0 : index
    %c0_11 = arith.constant 0 : index
    %9 = vector.load %arg5[%c0_10, %c0_11] : memref<8x1xf32, #tpu.memory_space<vmem>>, vector<8x1xf32>
    %cst_12 = arith.constant dense<0.000000e+00> : vector<8xf32>
    %10 = vector.multi_reduction <add>, %7, %cst_12 [1] : vector<8x512xf32> to vector<8xf32>
    %11 = vector.shape_cast %10 : vector<8xf32> to vector<8x1xf32>
    %12 = arith.mulf %7, %7 : vector<8x512xf32>
    %cst_13 = arith.constant dense<0.000000e+00> : vector<8xf32>
    %13 = vector.multi_reduction <add>, %12, %cst_13 [1] : vector<8x512xf32> to vector<8xf32>
    %14 = vector.shape_cast %13 : vector<8xf32> to vector<8x1xf32>
    %cst_14 = arith.constant 0.001953125 : f32
    %15 = vector.broadcast %cst_14 : f32 to vector<8x1xf32>
    %16 = arith.mulf %11, %15 : vector<8x1xf32>
    %cst_15 = arith.constant 0.001953125 : f32
    %17 = vector.broadcast %cst_15 : f32 to vector<8x1xf32>
    %18 = arith.mulf %14, %17 : vector<8x1xf32>
    %19 = arith.mulf %16, %16 : vector<8x1xf32>
    %20 = arith.subf %18, %19 : vector<8x1xf32>
    %cst_16 = arith.constant 9.99999974E-6 : f32
    %21 = vector.broadcast %cst_16 : f32 to vector<8x1xf32>
    %22 = arith.addf %20, %21 : vector<8x1xf32>
    %23 = math.rsqrt %22 : vector<8x1xf32>
    %24 = arith.mulf %8, %23 : vector<8x1xf32>
    %25 = vector.broadcast %16 : vector<8x1xf32> to vector<8x512xf32>
    %26 = arith.subf %7, %25 : vector<8x512xf32>
    %27 = vector.broadcast %24 : vector<8x1xf32> to vector<8x512xf32>
    %28 = arith.mulf %26, %27 : vector<8x512xf32>
    %29 = vector.broadcast %9 : vector<8x1xf32> to vector<8x512xf32>
    %30 = arith.addf %28, %29 : vector<8x512xf32>
    %cst_17 = arith.constant 0.000000e+00 : f32
    %31 = vector.broadcast %cst_17 : f32 to vector<8x512xf32>
    %32 = arith.maximumf %30, %31 : vector<8x512xf32>
    %c0_18 = arith.constant 0 : index
    %c0_19 = arith.constant 0 : index
    %33 = vector.load %arg6[%c0_18, %c0_19] : memref<8x9xf32, #tpu.memory_space<vmem>>, vector<8x9xf32>
    %c1_i32 = arith.constant 1 : i32
    %34 = vector.broadcast %c1_i32 : i32 to vector<1x512xi32>
    %35 = arith.cmpi sge, %2, %34 : vector<1x512xi32>
    %36 = arith.extui %35 : vector<1x512xi1> to vector<1x512xi32>
    %37 = arith.sitofp %36 : vector<1x512xi32> to vector<1x512xf32>
    %c15_i32 = arith.constant 15 : i32
    %38 = vector.broadcast %c15_i32 : i32 to vector<1x512xi32>
    %39 = arith.cmpi slt, %2, %38 : vector<1x512xi32>
    %40 = arith.extui %39 : vector<1x512xi1> to vector<1x512xi32>
    %41 = arith.sitofp %40 : vector<1x512xi32> to vector<1x512xf32>
    %c1_i32_20 = arith.constant 1 : i32
    %42 = vector.broadcast %c1_i32_20 : i32 to vector<1x512xi32>
    %43 = arith.cmpi sge, %3, %42 : vector<1x512xi32>
    %44 = arith.extui %43 : vector<1x512xi1> to vector<1x512xi32>
    %45 = arith.sitofp %44 : vector<1x512xi32> to vector<1x512xf32>
    %c15_i32_21 = arith.constant 15 : i32
    %46 = vector.broadcast %c15_i32_21 : i32 to vector<1x512xi32>
    %47 = arith.cmpi slt, %3, %46 : vector<1x512xi32>
    %48 = arith.extui %47 : vector<1x512xi1> to vector<1x512xi32>
    %49 = arith.sitofp %48 : vector<1x512xi32> to vector<1x512xf32>
    %c17_i32 = arith.constant 17 : i32
    %50 = tpu.dynamic_rotate %32 by %c17_i32 dim 1 : vector<8x512xf32>, i32 -> vector<8x512xf32>
    %51 = vector.extract_strided_slice %33 {offsets = [0, 0], sizes = [8, 1], strides = [1, 1]} : vector<8x9xf32> to vector<8x1xf32>
    %52 = arith.mulf %37, %45 : vector<1x512xf32>
    %53 = vector.broadcast %52 : vector<1x512xf32> to vector<8x512xf32>
    %54 = arith.mulf %50, %53 : vector<8x512xf32>
    %55 = vector.broadcast %51 : vector<8x1xf32> to vector<8x512xf32>
    %56 = arith.mulf %55, %54 : vector<8x512xf32>
    %c16_i32 = arith.constant 16 : i32
    %57 = tpu.dynamic_rotate %32 by %c16_i32 dim 1 : vector<8x512xf32>, i32 -> vector<8x512xf32>
    %58 = vector.extract_strided_slice %33 {offsets = [0, 1], sizes = [8, 1], strides = [1, 1]} : vector<8x9xf32> to vector<8x1xf32>
    %59 = vector.broadcast %37 : vector<1x512xf32> to vector<8x512xf32>
    %60 = arith.mulf %57, %59 : vector<8x512xf32>
    %61 = vector.broadcast %58 : vector<8x1xf32> to vector<8x512xf32>
    %62 = arith.mulf %61, %60 : vector<8x512xf32>
    %63 = arith.addf %56, %62 : vector<8x512xf32>
    %c15_i32_22 = arith.constant 15 : i32
    %64 = tpu.dynamic_rotate %32 by %c15_i32_22 dim 1 : vector<8x512xf32>, i32 -> vector<8x512xf32>
    %65 = vector.extract_strided_slice %33 {offsets = [0, 2], sizes = [8, 1], strides = [1, 1]} : vector<8x9xf32> to vector<8x1xf32>
    %66 = arith.mulf %37, %49 : vector<1x512xf32>
    %67 = vector.broadcast %66 : vector<1x512xf32> to vector<8x512xf32>
    %68 = arith.mulf %64, %67 : vector<8x512xf32>
    %69 = vector.broadcast %65 : vector<8x1xf32> to vector<8x512xf32>
    %70 = arith.mulf %69, %68 : vector<8x512xf32>
    %71 = arith.addf %63, %70 : vector<8x512xf32>
    %c1_i32_23 = arith.constant 1 : i32
    %72 = tpu.dynamic_rotate %32 by %c1_i32_23 dim 1 : vector<8x512xf32>, i32 -> vector<8x512xf32>
    %73 = vector.extract_strided_slice %33 {offsets = [0, 3], sizes = [8, 1], strides = [1, 1]} : vector<8x9xf32> to vector<8x1xf32>
    %74 = vector.broadcast %45 : vector<1x512xf32> to vector<8x512xf32>
    %75 = arith.mulf %72, %74 : vector<8x512xf32>
    %76 = vector.broadcast %73 : vector<8x1xf32> to vector<8x512xf32>
    %77 = arith.mulf %76, %75 : vector<8x512xf32>
    %78 = arith.addf %71, %77 : vector<8x512xf32>
    %79 = vector.extract_strided_slice %33 {offsets = [0, 4], sizes = [8, 1], strides = [1, 1]} : vector<8x9xf32> to vector<8x1xf32>
    %80 = vector.broadcast %79 : vector<8x1xf32> to vector<8x512xf32>
    %81 = arith.mulf %80, %32 : vector<8x512xf32>
    %82 = arith.addf %78, %81 : vector<8x512xf32>
    %c511_i32 = arith.constant 511 : i32
    %83 = tpu.dynamic_rotate %32 by %c511_i32 dim 1 : vector<8x512xf32>, i32 -> vector<8x512xf32>
    %84 = vector.extract_strided_slice %33 {offsets = [0, 5], sizes = [8, 1], strides = [1, 1]} : vector<8x9xf32> to vector<8x1xf32>
    %85 = vector.broadcast %49 : vector<1x512xf32> to vector<8x512xf32>
    %86 = arith.mulf %83, %85 : vector<8x512xf32>
    %87 = vector.broadcast %84 : vector<8x1xf32> to vector<8x512xf32>
    %88 = arith.mulf %87, %86 : vector<8x512xf32>
    %89 = arith.addf %82, %88 : vector<8x512xf32>
    %c497_i32 = arith.constant 497 : i32
    %90 = tpu.dynamic_rotate %32 by %c497_i32 dim 1 : vector<8x512xf32>, i32 -> vector<8x512xf32>
    %91 = vector.extract_strided_slice %33 {offsets = [0, 6], sizes = [8, 1], strides = [1, 1]} : vector<8x9xf32> to vector<8x1xf32>
    %92 = arith.mulf %41, %45 : vector<1x512xf32>
    %93 = vector.broadcast %92 : vector<1x512xf32> to vector<8x512xf32>
    %94 = arith.mulf %90, %93 : vector<8x512xf32>
    %95 = vector.broadcast %91 : vector<8x1xf32> to vector<8x512xf32>
    %96 = arith.mulf %95, %94 : vector<8x512xf32>
    %97 = arith.addf %89, %96 : vector<8x512xf32>
    %c496_i32 = arith.constant 496 : i32
    %98 = tpu.dynamic_rotate %32 by %c496_i32 dim 1 : vector<8x512xf32>, i32 -> vector<8x512xf32>
    %99 = vector.extract_strided_slice %33 {offsets = [0, 7], sizes = [8, 1], strides = [1, 1]} : vector<8x9xf32> to vector<8x1xf32>
    %100 = vector.broadcast %41 : vector<1x512xf32> to vector<8x512xf32>
    %101 = arith.mulf %98, %100 : vector<8x512xf32>
    %102 = vector.broadcast %99 : vector<8x1xf32> to vector<8x512xf32>
    %103 = arith.mulf %102, %101 : vector<8x512xf32>
    %104 = arith.addf %97, %103 : vector<8x512xf32>
    %c495_i32 = arith.constant 495 : i32
    %105 = tpu.dynamic_rotate %32 by %c495_i32 dim 1 : vector<8x512xf32>, i32 -> vector<8x512xf32>
    %106 = vector.extract_strided_slice %33 {offsets = [0, 8], sizes = [8, 1], strides = [1, 1]} : vector<8x9xf32> to vector<8x1xf32>
    %107 = arith.mulf %41, %49 : vector<1x512xf32>
    %108 = vector.broadcast %107 : vector<1x512xf32> to vector<8x512xf32>
    %109 = arith.mulf %105, %108 : vector<8x512xf32>
    %110 = vector.broadcast %106 : vector<8x1xf32> to vector<8x512xf32>
    %111 = arith.mulf %110, %109 : vector<8x512xf32>
    %112 = arith.addf %104, %111 : vector<8x512xf32>
    %c0_24 = arith.constant 0 : index
    %c0_25 = arith.constant 0 : index
    %113 = vector.load %arg7[%c0_24, %c0_25] : memref<8x1xf32, #tpu.memory_space<vmem>>, vector<8x1xf32>
    %c0_26 = arith.constant 0 : index
    %c0_27 = arith.constant 0 : index
    %114 = vector.load %arg8[%c0_26, %c0_27] : memref<8x1xf32, #tpu.memory_space<vmem>>, vector<8x1xf32>
    %cst_28 = arith.constant dense<0.000000e+00> : vector<8xf32>
    %115 = vector.multi_reduction <add>, %112, %cst_28 [1] : vector<8x512xf32> to vector<8xf32>
    %116 = vector.shape_cast %115 : vector<8xf32> to vector<8x1xf32>
    %117 = arith.mulf %112, %112 : vector<8x512xf32>
    %cst_29 = arith.constant dense<0.000000e+00> : vector<8xf32>
    %118 = vector.multi_reduction <add>, %117, %cst_29 [1] : vector<8x512xf32> to vector<8xf32>
    %119 = vector.shape_cast %118 : vector<8xf32> to vector<8x1xf32>
    %cst_30 = arith.constant 0.001953125 : f32
    %120 = vector.broadcast %cst_30 : f32 to vector<8x1xf32>
    %121 = arith.mulf %116, %120 : vector<8x1xf32>
    %cst_31 = arith.constant 0.001953125 : f32
    %122 = vector.broadcast %cst_31 : f32 to vector<8x1xf32>
    %123 = arith.mulf %119, %122 : vector<8x1xf32>
    %124 = arith.mulf %121, %121 : vector<8x1xf32>
    %125 = arith.subf %123, %124 : vector<8x1xf32>
    %cst_32 = arith.constant 9.99999974E-6 : f32
    %126 = vector.broadcast %cst_32 : f32 to vector<8x1xf32>
    %127 = arith.addf %125, %126 : vector<8x1xf32>
    %128 = math.rsqrt %127 : vector<8x1xf32>
    %129 = arith.mulf %113, %128 : vector<8x1xf32>
    %130 = vector.broadcast %121 : vector<8x1xf32> to vector<8x512xf32>
    %131 = arith.subf %112, %130 : vector<8x512xf32>
    %132 = vector.broadcast %129 : vector<8x1xf32> to vector<8x512xf32>
    %133 = arith.mulf %131, %132 : vector<8x512xf32>
    %134 = vector.broadcast %114 : vector<8x1xf32> to vector<8x512xf32>
    %135 = arith.addf %133, %134 : vector<8x512xf32>
    %c0_33 = arith.constant 0 : index
    %c0_34 = arith.constant 0 : index
    %136 = vector.load %arg9[%c0_33, %c0_34] : memref<8x8xf32, #tpu.memory_space<vmem>>, vector<8x8xf32>
    %c0_35 = arith.constant 0 : index
    %c0_36 = arith.constant 0 : index
    %137 = vector.load %arg10[%c0_35, %c0_36] : memref<8x8xf32, #tpu.memory_space<vmem>>, vector<8x8xf32>
    %cst_37 = arith.constant dense<0.000000e+00> : vector<8x512xf32>
    %138 = tpu.matmul %136, %135, %cst_37 {dimension_numbers = #tpu.dot_dimension_numbers<[1], [0], [0], [1], [0, 0, 1, 1], [], []>} : vector<8x8xf32>, vector<8x512xf32>, vector<8x512xf32> -> vector<8x512xf32>
    %cst_38 = arith.constant dense<0.000000e+00> : vector<8x512xf32>
    %139 = tpu.matmul %137, %138, %cst_38 {dimension_numbers = #tpu.dot_dimension_numbers<[1], [0], [0], [1], [0, 0, 1, 1], [], []>} : vector<8x8xf32>, vector<8x512xf32>, vector<8x512xf32> -> vector<8x512xf32>
    %c0_39 = arith.constant 0 : index
    %c0_40 = arith.constant 0 : index
    %140 = vector.load %arg11[%c0_39, %c0_40] : memref<8x1xf32, #tpu.memory_space<vmem>>, vector<8x1xf32>
    %c0_41 = arith.constant 0 : index
    %c0_42 = arith.constant 0 : index
    %141 = vector.load %arg12[%c0_41, %c0_42] : memref<8x1xf32, #tpu.memory_space<vmem>>, vector<8x1xf32>
    %cst_43 = arith.constant dense<0.000000e+00> : vector<8xf32>
    %142 = vector.multi_reduction <add>, %139, %cst_43 [1] : vector<8x512xf32> to vector<8xf32>
    %143 = vector.shape_cast %142 : vector<8xf32> to vector<8x1xf32>
    %144 = arith.mulf %139, %139 : vector<8x512xf32>
    %cst_44 = arith.constant dense<0.000000e+00> : vector<8xf32>
    %145 = vector.multi_reduction <add>, %144, %cst_44 [1] : vector<8x512xf32> to vector<8xf32>
    %146 = vector.shape_cast %145 : vector<8xf32> to vector<8x1xf32>
    %cst_45 = arith.constant 0.001953125 : f32
    %147 = vector.broadcast %cst_45 : f32 to vector<8x1xf32>
    %148 = arith.mulf %143, %147 : vector<8x1xf32>
    %cst_46 = arith.constant 0.001953125 : f32
    %149 = vector.broadcast %cst_46 : f32 to vector<8x1xf32>
    %150 = arith.mulf %146, %149 : vector<8x1xf32>
    %151 = arith.mulf %148, %148 : vector<8x1xf32>
    %152 = arith.subf %150, %151 : vector<8x1xf32>
    %cst_47 = arith.constant 9.99999974E-6 : f32
    %153 = vector.broadcast %cst_47 : f32 to vector<8x1xf32>
    %154 = arith.addf %152, %153 : vector<8x1xf32>
    %155 = math.rsqrt %154 : vector<8x1xf32>
    %156 = arith.mulf %140, %155 : vector<8x1xf32>
    %157 = vector.broadcast %148 : vector<8x1xf32> to vector<8x512xf32>
    %158 = arith.subf %139, %157 : vector<8x512xf32>
    %159 = vector.broadcast %156 : vector<8x1xf32> to vector<8x512xf32>
    %160 = arith.mulf %158, %159 : vector<8x512xf32>
    %161 = vector.broadcast %141 : vector<8x1xf32> to vector<8x512xf32>
    %162 = arith.addf %160, %161 : vector<8x512xf32>
    %cst_48 = arith.constant 0.000000e+00 : f32
    %163 = vector.broadcast %cst_48 : f32 to vector<8x512xf32>
    %164 = arith.maximumf %162, %163 : vector<8x512xf32>
    %c0_49 = arith.constant 0 : index
    %c0_50 = arith.constant 0 : index
    %165 = vector.load %arg13[%c0_49, %c0_50] : memref<8x512xf32, #tpu.memory_space<vmem>>, vector<8x512xf32>
    tpu.vector_store %arg13[%c0_49, %c0_50], %164 {strides = array<i32>} : memref<8x512xf32, #tpu.memory_space<vmem>>, vector<8x512xf32>,
    return
  }
}

</mosaic_0001>

<llo_original>
// kernel: _lambda_.1
$region0: #{_lambda_.1}
  #allocation0 [shape = 'u32[]', space=smem, size = 0x4, offset = 0x4, fixed_abs, tag = 'smem constant byte address 0x4 - core index']
  #allocation1 [shape = 'u32[72,128]{1,0:T(1,128)}', space=vmem, size = 0x9000, scoped, tag = 'internal scratch']
  %s0 = inlined_call_operand.vmem [shape: f32[8,512], index: 0, kind: input, shape index: {}]
  %s1 = inlined_call_operand.vmem [shape: s32[2,512], index: 1, kind: input, shape index: {}]
  %s2 = inlined_call_operand.vmem [shape: f32[8,8], index: 2, kind: input, shape index: {}]
  %s3 = inlined_call_operand.vmem [shape: f32[8,8], index: 3, kind: input, shape index: {}]
  %s4 = inlined_call_operand.vmem [shape: f32[8,1], index: 4, kind: input, shape index: {}, may-alias: {4,7,11}]
  %s5 = inlined_call_operand.vmem [shape: f32[8,1], index: 5, kind: input, shape index: {}, may-alias: {5,8,12}]
  %s6 = inlined_call_operand.vmem [shape: f32[8,9], index: 6, kind: input, shape index: {}]
  %s7 = inlined_call_operand.vmem [shape: f32[8,1], index: 7, kind: input, shape index: {}, may-alias: {4,7,11}]
  %s8 = inlined_call_operand.vmem [shape: f32[8,1], index: 8, kind: input, shape index: {}, may-alias: {5,8,12}]
  %s9 = inlined_call_operand.vmem [shape: f32[8,8], index: 9, kind: input, shape index: {}]
  %s10 = inlined_call_operand.vmem [shape: f32[8,8], index: 10, kind: input, shape index: {}]
  %s11 = inlined_call_operand.vmem [shape: f32[8,1], index: 11, kind: input, shape index: {}, may-alias: {4,7,11}]
  %s12 = inlined_call_operand.vmem [shape: f32[8,1], index: 12, kind: input, shape index: {}, may-alias: {5,8,12}]
  %s13 = inlined_call_operand.vmem [shape: f32[8,512], index: 13, kind: output, shape index: {}]
  %s14 = sld [smem:[#allocation0]]
  $region62: #{_lambda_.1} parent=0
    _
  %s16 = ssub.s32 1, %s14
  %s17 = scalar_select 0, %s16, %s14
  // Predicated region
  $region2: #{_lambda_.1} parent=0 // pred_check
    _
  $region3: #{_lambda_.1} parent=0 // pred_check_branch
    %19 = sbr.rel (0) target = $region5
  $region4: #{_lambda_.1} parent=0 // pred_region
    _
  $region5: #{_lambda_.1} parent=0 // pred_fallthru
    _
  // Predicated region
  $region6: #{_lambda_.1} parent=0 // pred_check
    _
  $region7: #{_lambda_.1} parent=0 // pred_check_branch
    %21 = sbr.rel (0) target = $region9
  $region8: #{_lambda_.1} parent=0 // pred_region
    _
  $region9: #{_lambda_.1} parent=0 // pred_fallthru
    _
  // Predicated region
  $region10: #{_lambda_.1} parent=0 // pred_check
    _
  $region11: #{_lambda_.1} parent=0 // pred_check_branch
    %23 = sbr.rel (0) target = $region13
  $region12: #{_lambda_.1} parent=0 // pred_region
    _
  $region13: #{_lambda_.1} parent=0 // pred_fallthru
    _
  // Predicated region
  $region14: #{_lambda_.1} parent=0 // pred_check
    _
  $region15: #{_lambda_.1} parent=0 // pred_check_branch
    %25 = sbr.rel (0) target = $region17
  $region16: #{_lambda_.1} parent=0 // pred_region
    _
  $region17: #{_lambda_.1} parent=0 // pred_fallthru
    _
  // Predicated region
  $region18: #{_lambda_.1} parent=0 // pred_check
    _
  $region19: #{_lambda_.1} parent=0 // pred_check_branch
    %27 = sbr.rel (0) target = $region21
  $region20: #{_lambda_.1} parent=0 // pred_region
    _
  $region21: #{_lambda_.1} parent=0 // pred_fallthru
    _
  // Predicated region
  $region22: #{_lambda_.1} parent=0 // pred_check
    _
  $region23: #{_lambda_.1} parent=0 // pred_check_branch
    %29 = sbr.rel (0) target = $region25
  $region24: #{_lambda_.1} parent=0 // pred_region
    _
  $region25: #{_lambda_.1} parent=0 // pred_fallthru
    _
  // Predicated region
  $region26: #{_lambda_.1} parent=0 // pred_check
    _
  $region27: #{_lambda_.1} parent=0 // pred_check_branch
    %31 = sbr.rel (0) target = $region29
  $region28: #{_lambda_.1} parent=0 // pred_region
    _
  $region29: #{_lambda_.1} parent=0 // pred_fallthru
    _
  // Predicated region
  $region30: #{_lambda_.1} parent=0 // pred_check
    _
  $region31: #{_lambda_.1} parent=0 // pred_check_branch
    %33 = sbr.rel (0) target = $region33
  $region32: #{_lambda_.1} parent=0 // pred_region
    _
  $region33: #{_lambda_.1} parent=0 // pred_fallthru
    _
  // Predicated region
  $region34: #{_lambda_.1} parent=0 // pred_check
    _
  $region35: #{_lambda_.1} parent=0 // pred_check_branch
    %35 = sbr.rel (0) target = $region37
  $region36: #{_lambda_.1} parent=0 // pred_region
    _
  $region37: #{_lambda_.1} parent=0 // pred_fallthru
    _
  // Predicated region
  $region38: #{_lambda_.1} parent=0 // pred_check
    _
  $region39: #{_lambda_.1} parent=0 // pred_check_branch
    %37 = sbr.rel (0) target = $region41
  $region40: #{_lambda_.1} parent=0 // pred_region
    _
  $region41: #{_lambda_.1} parent=0 // pred_fallthru
    _
  // Predicated region
  $region42: #{_lambda_.1} parent=0 // pred_check
    _
  $region43: #{_lambda_.1} parent=0 // pred_check_branch
    %39 = sbr.rel (0) target = $region45
  $region44: #{_lambda_.1} parent=0 // pred_region
    _
  $region45: #{_lambda_.1} parent=0 // pred_fallthru
    _
  // Predicated region
  $region46: #{_lambda_.1} parent=0 // pred_check
    _
  $region47: #{_lambda_.1} parent=0 // pred_check_branch
    %41 = sbr.rel (0) target = $region49
  $region48: #{_lambda_.1} parent=0 // pred_region
    _
  $region49: #{_lambda_.1} parent=0 // pred_fallthru
    _
  // Predicated region
  $region50: #{_lambda_.1} parent=0 // pred_check
    _
  $region51: #{_lambda_.1} parent=0 // pred_check_branch
    %43 = sbr.rel (0) target = $region53
  $region52: #{_lambda_.1} parent=0 // pred_region
    _
  $region53: #{_lambda_.1} parent=0 // pred_fallthru
    _
  %v44 = vld [vmem:[%s0] sm:$0xff]
  %v45 = vld [vmem:[%s0 + $0x8] sm:$0xff]
  %v46 = vld [vmem:[%s0 + $0x10] sm:$0xff]
  %v47 = vld [vmem:[%s0 + $0x18] sm:$0xff]
  %v48 = vld [vmem:[%s1] sm:$0xff]
  %v49 = vld [vmem:[%s2] sm:$0xff]
  %v50 = vld [vmem:[%s3] sm:$0xff]
  %vm51 = vcmask 64512
  %v53 = vsel %vm51, %v49, 0
  %55 = vmatpush.msra.mxu0 0.0
  %56 = vmatpush.msra.mxu0 0.0
  %57 = vmatpush.msra.mxu0 0.0
  %58 = vmatpush.msra.mxu0 0.0
  %59 = vmatpush.msra.mxu0 0.0
  %60 = vmatpush.msra.mxu0 0.0
  %61 = vmatpush.msra.mxu0 0.0
  %62 = vmatpush.msra.mxu0 0.0
  %63 = vmatpush.msra.mxu0 0.0
  %64 = vmatpush.msra.mxu0 0.0
  %65 = vmatpush.msra.mxu0 0.0
  %66 = vmatpush.msra.mxu0 0.0
  %67 = vmatpush.msra.mxu0 0.0
  %68 = vmatpush.msra.mxu0 0.0
  %69 = vmatpush.msra.mxu0 0.0
  %70 = vmatpush.msra.mxu0 %v44
  %71 = vmatmul.f32.gmra.mxu0 %v53
  %v72 = vpop.f32.mrf.mxu0
  %v73 = vadd.f32 0.0, %v72
  %74 = vdwg.mxu0
  %75 = vmatpush.msra.mxu0 0.0
  %76 = vmatpush.msra.mxu0 0.0
  %77 = vmatpush.msra.mxu0 0.0
  %78 = vmatpush.msra.mxu0 0.0
  %79 = vmatpush.msra.mxu0 0.0
  %80 = vmatpush.msra.mxu0 0.0
  %81 = vmatpush.msra.mxu0 0.0
  %82 = vmatpush.msra.mxu0 0.0
  %83 = vmatpush.msra.mxu0 0.0
  %84 = vmatpush.msra.mxu0 0.0
  %85 = vmatpush.msra.mxu0 0.0
  %86 = vmatpush.msra.mxu0 0.0
  %87 = vmatpush.msra.mxu0 0.0
  %88 = vmatpush.msra.mxu0 0.0
  %89 = vmatpush.msra.mxu0 0.0
  %90 = vmatpush.msra.mxu0 %v45
  %91 = vmatmul.f32.gmra.mxu0 %v53
  %v92 = vpop.f32.mrf.mxu0
  %v93 = vadd.f32 0.0, %v92
  %94 = vdwg.mxu0
  %95 = vmatpush.msra.mxu0 0.0
  %96 = vmatpush.msra.mxu0 0.0
  %97 = vmatpush.msra.mxu0 0.0
  %98 = vmatpush.msra.mxu0 0.0
  %99 = vmatpush.msra.mxu0 0.0
  %100 = vmatpush.msra.mxu0 0.0
  %101 = vmatpush.msra.mxu0 0.0
  %102 = vmatpush.msra.mxu0 0.0
  %103 = vmatpush.msra.mxu0 0.0
  %104 = vmatpush.msra.mxu0 0.0
  %105 = vmatpush.msra.mxu0 0.0
  %106 = vmatpush.msra.mxu0 0.0
  %107 = vmatpush.msra.mxu0 0.0
  %108 = vmatpush.msra.mxu0 0.0
  %109 = vmatpush.msra.mxu0 0.0
  %110 = vmatpush.msra.mxu0 %v46
  %111 = vmatmul.f32.gmra.mxu0 %v53
  %v112 = vpop.f32.mrf.mxu0
  %v113 = vadd.f32 0.0, %v112
  %114 = vdwg.mxu0
  %115 = vmatpush.msra.mxu0 0.0
  %116 = vmatpush.msra.mxu0 0.0
  %117 = vmatpush.msra.mxu0 0.0
  %118 = vmatpush.msra.mxu0 0.0
  %119 = vmatpush.msra.mxu0 0.0
  %120 = vmatpush.msra.mxu0 0.0
  %121 = vmatpush.msra.mxu0 0.0
  %122 = vmatpush.msra.mxu0 0.0
  %123 = vmatpush.msra.mxu0 0.0
  %124 = vmatpush.msra.mxu0 0.0
  %125 = vmatpush.msra.mxu0 0.0
  %126 = vmatpush.msra.mxu0 0.0
  %127 = vmatpush.msra.mxu0 0.0
  %128 = vmatpush.msra.mxu0 0.0
  %129 = vmatpush.msra.mxu0 0.0
  %130 = vmatpush.msra.mxu0 %v47
  %131 = vmatmul.f32.gmra.mxu0 %v53
  %v132 = vpop.f32.mrf.mxu0
  %v133 = vadd.f32 0.0, %v132
  %134 = vdwg.mxu0
  %v136 = vsel %vm51, %v50, 0
  %138 = vmatpush.msra.mxu0 0.0
  %139 = vmatpush.msra.mxu0 0.0
  %140 = vmatpush.msra.mxu0 0.0
  %141 = vmatpush.msra.mxu0 0.0
  %142 = vmatpush.msra.mxu0 0.0
  %143 = vmatpush.msra.mxu0 0.0
  %144 = vmatpush.msra.mxu0 0.0
  %145 = vmatpush.msra.mxu0 0.0
  %146 = vmatpush.msra.mxu0 0.0
  %147 = vmatpush.msra.mxu0 0.0
  %148 = vmatpush.msra.mxu0 0.0
  %149 = vmatpush.msra.mxu0 0.0
  %150 = vmatpush.msra.mxu0 0.0
  %151 = vmatpush.msra.mxu0 0.0
  %152 = vmatpush.msra.mxu0 0.0
  %153 = vmatpush.msra.mxu0 %v73
  %154 = vmatmul.f32.gmra.mxu0 %v136
  %v155 = vpop.f32.mrf.mxu0
  %v156 = vadd.f32 0.0, %v155
  %157 = vdwg.mxu0
  %158 = vmatpush.msra.mxu0 0.0
  %159 = vmatpush.msra.mxu0 0.0
  %160 = vmatpush.msra.mxu0 0.0
  %161 = vmatpush.msra.mxu0 0.0
  %162 = vmatpush.msra.mxu0 0.0
  %163 = vmatpush.msra.mxu0 0.0
  %164 = vmatpush.msra.mxu0 0.0
  %165 = vmatpush.msra.mxu0 0.0
  %166 = vmatpush.msra.mxu0 0.0
  %167 = vmatpush.msra.mxu0 0.0
  %168 = vmatpush.msra.mxu0 0.0
  %169 = vmatpush.msra.mxu0 0.0
  %170 = vmatpush.msra.mxu0 0.0
  %171 = vmatpush.msra.mxu0 0.0
  %172 = vmatpush.msra.mxu0 0.0
  %173 = vmatpush.msra.mxu0 %v93
  %174 = vmatmul.f32.gmra.mxu0 %v136
  %v175 = vpop.f32.mrf.mxu0
  %v176 = vadd.f32 0.0, %v175
  %177 = vdwg.mxu0
  %178 = vmatpush.msra.mxu0 0.0
  %179 = vmatpush.msra.mxu0 0.0
  %180 = vmatpush.msra.mxu0 0.0
  %181 = vmatpush.msra.mxu0 0.0
  %182 = vmatpush.msra.mxu0 0.0
  %183 = vmatpush.msra.mxu0 0.0
  %184 = vmatpush.msra.mxu0 0.0
  %185 = vmatpush.msra.mxu0 0.0
  %186 = vmatpush.msra.mxu0 0.0
  %187 = vmatpush.msra.mxu0 0.0
  %188 = vmatpush.msra.mxu0 0.0
  %189 = vmatpush.msra.mxu0 0.0
  %190 = vmatpush.msra.mxu0 0.0
  %191 = vmatpush.msra.mxu0 0.0
  %192 = vmatpush.msra.mxu0 0.0
  %193 = vmatpush.msra.mxu0 %v113
  %194 = vmatmul.f32.gmra.mxu0 %v136
  %v195 = vpop.f32.mrf.mxu0
  %v196 = vadd.f32 0.0, %v195
  %197 = vdwg.mxu0
  %198 = vmatpush.msra.mxu0 0.0
  %199 = vmatpush.msra.mxu0 0.0
  %200 = vmatpush.msra.mxu0 0.0
  %201 = vmatpush.msra.mxu0 0.0
  %202 = vmatpush.msra.mxu0 0.0
  %203 = vmatpush.msra.mxu0 0.0
  %204 = vmatpush.msra.mxu0 0.0
  %205 = vmatpush.msra.mxu0 0.0
  %206 = vmatpush.msra.mxu0 0.0
  %207 = vmatpush.msra.mxu0 0.0
  %208 = vmatpush.msra.mxu0 0.0
  %209 = vmatpush.msra.mxu0 0.0
  %210 = vmatpush.msra.mxu0 0.0
  %211 = vmatpush.msra.mxu0 0.0
  %212 = vmatpush.msra.mxu0 0.0
  %213 = vmatpush.msra.mxu0 %v133
  %214 = vmatmul.f32.gmra.mxu0 %v136
  %v215 = vpop.f32.mrf.mxu0
  %v216 = vadd.f32 0.0, %v215
  %217 = vdwg.mxu0
  %v218 = vld [vmem:[%s4] sm:$0xff]
  %v219 = vld [vmem:[%s5] sm:$0xff]
  %v220 = vadd.f32 %v156, %v176
  %v221 = vadd.f32 %v220, %v196
  %v222 = vadd.f32 %v221, %v216
  %223 = vadd.xlane.f32.xlu0 %v222
  %v224 = vpop.xlane.xlu0 %223
  %v225 = vmul.f32 %v156, %v156
  %v226 = vmul.f32 %v176, %v176
  %v227 = vmul.f32 %v196, %v196
  %v228 = vmul.f32 %v216, %v216
  %v229 = vadd.f32 %v225, %v226
  %v230 = vadd.f32 %v229, %v227
  %v231 = vadd.f32 %v230, %v228
  %232 = vadd.xlane.f32.xlu0 %v231
  %v233 = vpop.xlane.xlu0 %232
  %v234 = vmul.f32 %v224, 0.001953125
  %v235 = vmul.f32 %v233, 0.001953125
  %v236 = vmul.f32 %v234, %v234
  %v237 = vsub.f32 %v235, %v236
  %v238 = vadd.f32 %v237, 1e-05
  %v239 = vrsqrt.pop %v238
  %v240 = vmul.f32 %v239, %v238
  %v241 = vmul.f32 %v240, %v239
  %v242 = vmul.f32 0.5, %v241
  %v243 = vsub.f32 1.5, %v242
  %v244 = vmul.f32 %v239, %v243
  %vm245 = vweird.f32 %v238
  %vm246 = vweird.f32 %v239
  %vm247 = vmor %vm245, %vm246
  %v248 = vsel %vm247, %v239, %v244
  %v249 = vmul.f32 %v218, %v248
  %v250 = vsub.f32 %v156, %v234
  %v251 = vsub.f32 %v176, %v234
  %v252 = vsub.f32 %v196, %v234
  %v253 = vsub.f32 %v216, %v234
  %255 = vset.pattern.permute.xlu0 0
  %256 = vperm.xlu0 %255, %v249
  %v257 = vpop.permute.xlu0 %256
  %v259 = vmul.f32 %v250, %v257
  %v260 = vmul.f32 %v251, %v257
  %v261 = vmul.f32 %v252, %v257
  %v262 = vmul.f32 %v253, %v257
  %264 = vset.pattern.permute.xlu0 0
  %265 = vperm.xlu0 %264, %v219
  %v266 = vpop.permute.xlu0 %265
  %v268 = vadd.f32 %v259, %v266
  %v269 = vadd.f32 %v260, %v266
  %v270 = vadd.f32 %v261, %v266
  %v271 = vadd.f32 %v262, %v266
  %v272 = vmax.f32 %v268, 0.0
  %v273 = vmax.f32 %v269, 0.0
  %v274 = vmax.f32 %v270, 0.0
  %v275 = vmax.f32 %v271, 0.0
  %v276 = vld [vmem:[%s6] sm:$0xff]
  %vm277 = vcmp.ge.s32.totalorder %v48, 1
  %v278 = vsel %vm277, 1, 0
  %v279 = vcvt.s32.f32 %v278
  %vm280 = vcmp.lt.s32.totalorder %v48, 15
  %v281 = vsel %vm280, 1, 0
  %v282 = vcvt.s32.f32 %v281
  %283 = vrot.lane.b32.xlu0 %v272, 17
  %v284 = vpop.permute.xlu0 %283
  %285 = vrot.lane.b32.xlu0 %v273, 17
  %v286 = vpop.permute.xlu0 %285
  %287 = vrot.lane.b32.xlu0 %v274, 17
  %v288 = vpop.permute.xlu0 %287
  %289 = vrot.lane.b32.xlu0 %v275, 17
  %v290 = vpop.permute.xlu0 %289
  %v291 = vlaneseq
  %v292 = vand.u32 %v291, 127
  %vm293 = vcmp.lt.s32.totalorder %v292, 17
  %v294 = vsel %vm293, %v288, %v290
  %v295 = vsel %vm293, %v286, %v288
  %v296 = vsel %vm293, %v284, %v286
  %v297 = vsel %vm293, %v290, %v284
  %v299 = vrot.slane %v279, 7
  %v300 = vrot.slane %v299, 2
  %v302 = vmul.f32 %v279, %v300
  %v304 = vperm.slane %v302, 0
  %v305 = vperm.slane %v302, 2
  %v306 = vperm.slane %v302, 4
  %v307 = vperm.slane %v302, 6
  %v312 = vperm.slane %v304, 0
  %v313 = vperm.slane %v305, 0
  %v314 = vperm.slane %v306, 0
  %v315 = vperm.slane %v307, 0
  %v316 = vmul.f32 %v297, %v312
  %v317 = vmul.f32 %v296, %v313
  %v318 = vmul.f32 %v295, %v314
  %v319 = vmul.f32 %v294, %v315
  %321 = vset.pattern.permute.xlu0 0
  %322 = vperm.xlu0 %321, %v276
  %v323 = vpop.permute.xlu0 %322
  %v325 = vmul.f32 %v323, %v316
  %v326 = vmul.f32 %v323, %v317
  %v327 = vmul.f32 %v323, %v318
  %v328 = vmul.f32 %v323, %v319
  %329 = vrot.lane.b32.xlu0 %v272, 16
  %v330 = vpop.permute.xlu0 %329
  %331 = vrot.lane.b32.xlu0 %v273, 16
  %v332 = vpop.permute.xlu0 %331
  %333 = vrot.lane.b32.xlu0 %v274, 16
  %v334 = vpop.permute.xlu0 %333
  %335 = vrot.lane.b32.xlu0 %v275, 16
  %v336 = vpop.permute.xlu0 %335
  %vm337 = vcmp.lt.s32.totalorder %v292, 16
  %v338 = vsel %vm337, %v334, %v336
  %v339 = vsel %vm337, %v332, %v334
  %v340 = vsel %vm337, %v330, %v332
  %v341 = vsel %vm337, %v336, %v330
  %v342 = vperm.slane %v279, 0
  %v343 = vperm.slane %v279, 2
  %v344 = vperm.slane %v279, 4
  %v345 = vperm.slane %v279, 6
  %v350 = vperm.slane %v342, 0
  %v351 = vperm.slane %v343, 0
  %v352 = vperm.slane %v344, 0
  %v353 = vperm.slane %v345, 0
  %v354 = vmul.f32 %v341, %v350
  %v355 = vmul.f32 %v340, %v351
  %v356 = vmul.f32 %v339, %v352
  %v357 = vmul.f32 %v338, %v353
  %358 = vset.pattern.permute.xlu0 1
  %359 = vperm.xlu0 %358, %v276
  %v360 = vpop.permute.xlu0 %359
  %v362 = vmul.f32 %v360, %v354
  %v363 = vmul.f32 %v360, %v355
  %v364 = vmul.f32 %v360, %v356
  %v365 = vmul.f32 %v360, %v357
  %v366 = vadd.f32 %v325, %v362
  %v367 = vadd.f32 %v326, %v363
  %v368 = vadd.f32 %v327, %v364
  %v369 = vadd.f32 %v328, %v365
  %370 = vrot.lane.b32.xlu0 %v272, 15
  %v371 = vpop.permute.xlu0 %370
  %372 = vrot.lane.b32.xlu0 %v273, 15
  %v373 = vpop.permute.xlu0 %372
  %374 = vrot.lane.b32.xlu0 %v274, 15
  %v375 = vpop.permute.xlu0 %374
  %376 = vrot.lane.b32.xlu0 %v275, 15
  %v377 = vpop.permute.xlu0 %376
  %vm378 = vcmp.lt.s32.totalorder %v292, 15
  %v379 = vsel %vm378, %v375, %v377
  %v380 = vsel %vm378, %v373, %v375
  %v381 = vsel %vm378, %v371, %v373
  %v382 = vsel %vm378, %v377, %v371
  %v384 = vrot.slane %v282, 7
  %v385 = vrot.slane %v384, 2
  %v387 = vmul.f32 %v279, %v385
  %v389 = vperm.slane %v387, 0
  %v390 = vperm.slane %v387, 2
  %v391 = vperm.slane %v387, 4
  %v392 = vperm.slane %v387, 6
  %v397 = vperm.slane %v389, 0
  %v398 = vperm.slane %v390, 0
  %v399 = vperm.slane %v391, 0
  %v400 = vperm.slane %v392, 0
  %v401 = vmul.f32 %v382, %v397
  %v402 = vmul.f32 %v381, %v398
  %v403 = vmul.f32 %v380, %v399
  %v404 = vmul.f32 %v379, %v400
  %405 = vset.pattern.permute.xlu0 2
  %406 = vperm.xlu0 %405, %v276
  %v407 = vpop.permute.xlu0 %406
  %v409 = vmul.f32 %v407, %v401
  %v410 = vmul.f32 %v407, %v402
  %v411 = vmul.f32 %v407, %v403
  %v412 = vmul.f32 %v407, %v404
  %v413 = vadd.f32 %v366, %v409
  %v414 = vadd.f32 %v367, %v410
  %v415 = vadd.f32 %v368, %v411
  %v416 = vadd.f32 %v369, %v412
  %417 = vrot.lane.b32.xlu0 %v272, 1
  %v418 = vpop.permute.xlu0 %417
  %419 = vrot.lane.b32.xlu0 %v273, 1
  %v420 = vpop.permute.xlu0 %419
  %421 = vrot.lane.b32.xlu0 %v274, 1
  %v422 = vpop.permute.xlu0 %421
  %423 = vrot.lane.b32.xlu0 %v275, 1
  %v424 = vpop.permute.xlu0 %423
  %vm425 = vcmp.lt.s32.totalorder %v292, 1
  %v426 = vsel %vm425, %v422, %v424
  %v427 = vsel %vm425, %v420, %v422
  %v428 = vsel %vm425, %v418, %v420
  %v429 = vsel %vm425, %v424, %v418
  %v430 = vperm.slane %v279, 1
  %v431 = vperm.slane %v279, 3
  %v432 = vperm.slane %v279, 5
  %v433 = vperm.slane %v279, 7
  %v438 = vperm.slane %v430, 1
  %v439 = vperm.slane %v431, 1
  %v440 = vperm.slane %v432, 1
  %v441 = vperm.slane %v433, 1
  %v442 = vmul.f32 %v429, %v438
  %v443 = vmul.f32 %v428, %v439
  %v444 = vmul.f32 %v427, %v440
  %v445 = vmul.f32 %v426, %v441
  %446 = vset.pattern.permute.xlu0 3
  %447 = vperm.xlu0 %446, %v276
  %v448 = vpop.permute.xlu0 %447
  %v450 = vmul.f32 %v448, %v442
  %v451 = vmul.f32 %v448, %v443
  %v452 = vmul.f32 %v448, %v444
  %v453 = vmul.f32 %v448, %v445
  %v454 = vadd.f32 %v413, %v450
  %v455 = vadd.f32 %v414, %v451
  %v456 = vadd.f32 %v415, %v452
  %v457 = vadd.f32 %v416, %v453
  %458 = vset.pattern.permute.xlu0 4
  %459 = vperm.xlu0 %458, %v276
  %v460 = vpop.permute.xlu0 %459
  %v462 = vmul.f32 %v460, %v272
  %v463 = vmul.f32 %v460, %v273
  %v464 = vmul.f32 %v460, %v274
  %v465 = vmul.f32 %v460, %v275
  %v466 = vadd.f32 %v454, %v462
  %v467 = vadd.f32 %v455, %v463
  %v468 = vadd.f32 %v456, %v464
  %v469 = vadd.f32 %v457, %v465
  %470 = vrot.lane.b32.xlu0 %v272, 127
  %v471 = vpop.permute.xlu0 %470
  %472 = vrot.lane.b32.xlu0 %v273, 127
  %v473 = vpop.permute.xlu0 %472
  %474 = vrot.lane.b32.xlu0 %v274, 127
  %v475 = vpop.permute.xlu0 %474
  %476 = vrot.lane.b32.xlu0 %v275, 127
  %v477 = vpop.permute.xlu0 %476
  %vm478 = vcmp.lt.s32.totalorder %v292, 127
  %v479 = vsel %vm478, %v475, %v477
  %v480 = vsel %vm478, %v473, %v475
  %v481 = vsel %vm478, %v471, %v473
  %v482 = vsel %vm478, %v477, %v471
  %v483 = vperm.slane %v282, 1
  %v484 = vperm.slane %v282, 3
  %v485 = vperm.slane %v282, 5
  %v486 = vperm.slane %v282, 7
  %v491 = vperm.slane %v483, 1
  %v492 = vperm.slane %v484, 1
  %v493 = vperm.slane %v485, 1
  %v494 = vperm.slane %v486, 1
  %v495 = vmul.f32 %v481, %v491
  %v496 = vmul.f32 %v480, %v492
  %v497 = vmul.f32 %v479, %v493
  %v498 = vmul.f32 %v482, %v494
  %499 = vset.pattern.permute.xlu0 5
  %500 = vperm.xlu0 %499, %v276
  %v501 = vpop.permute.xlu0 %500
  %v503 = vmul.f32 %v501, %v495
  %v504 = vmul.f32 %v501, %v496
  %v505 = vmul.f32 %v501, %v497
  %v506 = vmul.f32 %v501, %v498
  %v507 = vadd.f32 %v466, %v503
  %v508 = vadd.f32 %v467, %v504
  %v509 = vadd.f32 %v468, %v505
  %v510 = vadd.f32 %v469, %v506
  %511 = vrot.lane.b32.xlu0 %v272, 113
  %v512 = vpop.permute.xlu0 %511
  %513 = vrot.lane.b32.xlu0 %v273, 113
  %v514 = vpop.permute.xlu0 %513
  %515 = vrot.lane.b32.xlu0 %v274, 113
  %v516 = vpop.permute.xlu0 %515
  %517 = vrot.lane.b32.xlu0 %v275, 113
  %v518 = vpop.permute.xlu0 %517
  %vm519 = vcmp.lt.s32.totalorder %v292, 113
  %v520 = vsel %vm519, %v516, %v518
  %v521 = vsel %vm519, %v514, %v516
  %v522 = vsel %vm519, %v512, %v514
  %v523 = vsel %vm519, %v518, %v512
  %v524 = vmul.f32 %v282, %v300
  %v526 = vperm.slane %v524, 0
  %v527 = vperm.slane %v524, 2
  %v528 = vperm.slane %v524, 4
  %v529 = vperm.slane %v524, 6
  %v534 = vperm.slane %v526, 0
  %v535 = vperm.slane %v527, 0
  %v536 = vperm.slane %v528, 0
  %v537 = vperm.slane %v529, 0
  %v538 = vmul.f32 %v522, %v534
  %v539 = vmul.f32 %v521, %v535
  %v540 = vmul.f32 %v520, %v536
  %v541 = vmul.f32 %v523, %v537
  %542 = vset.pattern.permute.xlu0 6
  %543 = vperm.xlu0 %542, %v276
  %v544 = vpop.permute.xlu0 %543
  %v546 = vmul.f32 %v544, %v538
  %v547 = vmul.f32 %v544, %v539
  %v548 = vmul.f32 %v544, %v540
  %v549 = vmul.f32 %v544, %v541
  %v550 = vadd.f32 %v507, %v546
  %v551 = vadd.f32 %v508, %v547
  %v552 = vadd.f32 %v509, %v548
  %v553 = vadd.f32 %v510, %v549
  %554 = vrot.lane.b32.xlu0 %v272, 112
  %v555 = vpop.permute.xlu0 %554
  %556 = vrot.lane.b32.xlu0 %v273, 112
  %v557 = vpop.permute.xlu0 %556
  %558 = vrot.lane.b32.xlu0 %v274, 112
  %v559 = vpop.permute.xlu0 %558
  %560 = vrot.lane.b32.xlu0 %v275, 112
  %v561 = vpop.permute.xlu0 %560
  %vm562 = vcmp.lt.s32.totalorder %v292, 112
  %v563 = vsel %vm562, %v559, %v561
  %v564 = vsel %vm562, %v557, %v559
  %v565 = vsel %vm562, %v555, %v557
  %v566 = vsel %vm562, %v561, %v555
  %v567 = vperm.slane %v282, 0
  %v568 = vperm.slane %v282, 2
  %v569 = vperm.slane %v282, 4
  %v570 = vperm.slane %v282, 6
  %v575 = vperm.slane %v567, 0
  %v576 = vperm.slane %v568, 0
  %v577 = vperm.slane %v569, 0
  %v578 = vperm.slane %v570, 0
  %v579 = vmul.f32 %v565, %v575
  %v580 = vmul.f32 %v564, %v576
  %v581 = vmul.f32 %v563, %v577
  %v582 = vmul.f32 %v566, %v578
  %583 = vset.pattern.permute.xlu0 7
  %584 = vperm.xlu0 %583, %v276
  %v585 = vpop.permute.xlu0 %584
  %v587 = vmul.f32 %v585, %v579
  %v588 = vmul.f32 %v585, %v580
  %v589 = vmul.f32 %v585, %v581
  %v590 = vmul.f32 %v585, %v582
  %v591 = vadd.f32 %v550, %v587
  %v592 = vadd.f32 %v551, %v588
  %v593 = vadd.f32 %v552, %v589
  %v594 = vadd.f32 %v553, %v590
  %595 = vrot.lane.b32.xlu0 %v272, 111
  %v596 = vpop.permute.xlu0 %595
  %597 = vrot.lane.b32.xlu0 %v273, 111
  %v598 = vpop.permute.xlu0 %597
  %599 = vrot.lane.b32.xlu0 %v274, 111
  %v600 = vpop.permute.xlu0 %599
  %601 = vrot.lane.b32.xlu0 %v275, 111
  %v602 = vpop.permute.xlu0 %601
  %vm603 = vcmp.lt.s32.totalorder %v292, 111
  %v604 = vsel %vm603, %v600, %v602
  %v605 = vsel %vm603, %v598, %v600
  %v606 = vsel %vm603, %v596, %v598
  %v607 = vsel %vm603, %v602, %v596
  %v608 = vmul.f32 %v282, %v385
  %v610 = vperm.slane %v608, 0
  %v611 = vperm.slane %v608, 2
  %v612 = vperm.slane %v608, 4
  %v613 = vperm.slane %v608, 6
  %v618 = vperm.slane %v610, 0
  %v619 = vperm.slane %v611, 0
  %v620 = vperm.slane %v612, 0
  %v621 = vperm.slane %v613, 0
  %v622 = vmul.f32 %v606, %v618
  %v623 = vmul.f32 %v605, %v619
  %v624 = vmul.f32 %v604, %v620
  %v625 = vmul.f32 %v607, %v621
  %626 = vset.pattern.permute.xlu0 8
  %627 = vperm.xlu0 %626, %v276
  %v628 = vpop.permute.xlu0 %627
  %v630 = vmul.f32 %v628, %v622
  %v631 = vmul.f32 %v628, %v623
  %v632 = vmul.f32 %v628, %v624
  %v633 = vmul.f32 %v628, %v625
  %v634 = vadd.f32 %v591, %v630
  %v635 = vadd.f32 %v592, %v631
  %v636 = vadd.f32 %v593, %v632
  %v637 = vadd.f32 %v594, %v633
  %v638 = vld [vmem:[%s7] sm:$0xff]
  %v639 = vld [vmem:[%s8] sm:$0xff]
  %v640 = vadd.f32 %v634, %v635
  %v641 = vadd.f32 %v640, %v636
  %v642 = vadd.f32 %v641, %v637
  %643 = vadd.xlane.f32.xlu0 %v642
  %v644 = vpop.xlane.xlu0 %643
  %v645 = vmul.f32 %v634, %v634
  %v646 = vmul.f32 %v635, %v635
  %v647 = vmul.f32 %v636, %v636
  %v648 = vmul.f32 %v637, %v637
  %v649 = vadd.f32 %v645, %v646
  %v650 = vadd.f32 %v649, %v647
  %v651 = vadd.f32 %v650, %v648
  %652 = vadd.xlane.f32.xlu0 %v651
  %v653 = vpop.xlane.xlu0 %652
  %v654 = vmul.f32 %v644, 0.001953125
  %v655 = vmul.f32 %v653, 0.001953125
  %v656 = vmul.f32 %v654, %v654
  %v657 = vsub.f32 %v655, %v656
  %v658 = vadd.f32 %v657, 1e-05
  %v659 = vrsqrt.pop %v658
  %v660 = vmul.f32 %v659, %v658
  %v661 = vmul.f32 %v660, %v659
  %v662 = vmul.f32 0.5, %v661
  %v663 = vsub.f32 1.5, %v662
  %v664 = vmul.f32 %v659, %v663
  %vm665 = vweird.f32 %v658
  %vm666 = vweird.f32 %v659
  %vm667 = vmor %vm665, %vm666
  %v668 = vsel %vm667, %v659, %v664
  %v669 = vmul.f32 %v638, %v668
  %v670 = vsub.f32 %v634, %v654
  %v671 = vsub.f32 %v635, %v654
  %v672 = vsub.f32 %v636, %v654
  %v673 = vsub.f32 %v637, %v654
  %675 = vset.pattern.permute.xlu0 0
  %676 = vperm.xlu0 %675, %v669
  %v677 = vpop.permute.xlu0 %676
  %v679 = vmul.f32 %v670, %v677
  %v680 = vmul.f32 %v671, %v677
  %v681 = vmul.f32 %v672, %v677
  %v682 = vmul.f32 %v673, %v677
  %684 = vset.pattern.permute.xlu0 0
  %685 = vperm.xlu0 %684, %v639
  %v686 = vpop.permute.xlu0 %685
  %v688 = vadd.f32 %v679, %v686
  %v689 = vadd.f32 %v680, %v686
  %v690 = vadd.f32 %v681, %v686
  %v691 = vadd.f32 %v682, %v686
  %v692 = vld [vmem:[%s9] sm:$0xff]
  %v693 = vld [vmem:[%s10] sm:$0xff]
  %v695 = vsel %vm51, %v692, 0
  %697 = vmatpush.msra.mxu0 0.0
  %698 = vmatpush.msra.mxu0 0.0
  %699 = vmatpush.msra.mxu0 0.0
  %700 = vmatpush.msra.mxu0 0.0
  %701 = vmatpush.msra.mxu0 0.0
  %702 = vmatpush.msra.mxu0 0.0
  %703 = vmatpush.msra.mxu0 0.0
  %704 = vmatpush.msra.mxu0 0.0
  %705 = vmatpush.msra.mxu0 0.0
  %706 = vmatpush.msra.mxu0 0.0
  %707 = vmatpush.msra.mxu0 0.0
  %708 = vmatpush.msra.mxu0 0.0
  %709 = vmatpush.msra.mxu0 0.0
  %710 = vmatpush.msra.mxu0 0.0
  %711 = vmatpush.msra.mxu0 0.0
  %712 = vmatpush.msra.mxu0 %v688
  %713 = vmatmul.f32.gmra.mxu0 %v695
  %v714 = vpop.f32.mrf.mxu0
  %v715 = vadd.f32 0.0, %v714
  %716 = vdwg.mxu0
  %717 = vmatpush.msra.mxu0 0.0
  %718 = vmatpush.msra.mxu0 0.0
  %719 = vmatpush.msra.mxu0 0.0
  %720 = vmatpush.msra.mxu0 0.0
  %721 = vmatpush.msra.mxu0 0.0
  %722 = vmatpush.msra.mxu0 0.0
  %723 = vmatpush.msra.mxu0 0.0
  %724 = vmatpush.msra.mxu0 0.0
  %725 = vmatpush.msra.mxu0 0.0
  %726 = vmatpush.msra.mxu0 0.0
  %727 = vmatpush.msra.mxu0 0.0
  %728 = vmatpush.msra.mxu0 0.0
  %729 = vmatpush.msra.mxu0 0.0
  %730 = vmatpush.msra.mxu0 0.0
  %731 = vmatpush.msra.mxu0 0.0
  %732 = vmatpush.msra.mxu0 %v689
  %733 = vmatmul.f32.gmra.mxu0 %v695
  %v734 = vpop.f32.mrf.mxu0
  %v735 = vadd.f32 0.0, %v734
  %736 = vdwg.mxu0
  %737 = vmatpush.msra.mxu0 0.0
  %738 = vmatpush.msra.mxu0 0.0
  %739 = vmatpush.msra.mxu0 0.0
  %740 = vmatpush.msra.mxu0 0.0
  %741 = vmatpush.msra.mxu0 0.0
  %742 = vmatpush.msra.mxu0 0.0
  %743 = vmatpush.msra.mxu0 0.0
  %744 = vmatpush.msra.mxu0 0.0
  %745 = vmatpush.msra.mxu0 0.0
  %746 = vmatpush.msra.mxu0 0.0
  %747 = vmatpush.msra.mxu0 0.0
  %748 = vmatpush.msra.mxu0 0.0
  %749 = vmatpush.msra.mxu0 0.0
  %750 = vmatpush.msra.mxu0 0.0
  %751 = vmatpush.msra.mxu0 0.0
  %752 = vmatpush.msra.mxu0 %v690
  %753 = vmatmul.f32.gmra.mxu0 %v695
  %v754 = vpop.f32.mrf.mxu0
  %v755 = vadd.f32 0.0, %v754
  %756 = vdwg.mxu0
  %757 = vmatpush.msra.mxu0 0.0
  %758 = vmatpush.msra.mxu0 0.0
  %759 = vmatpush.msra.mxu0 0.0
  %760 = vmatpush.msra.mxu0 0.0
  %761 = vmatpush.msra.mxu0 0.0
  %762 = vmatpush.msra.mxu0 0.0
  %763 = vmatpush.msra.mxu0 0.0
  %764 = vmatpush.msra.mxu0 0.0
  %765 = vmatpush.msra.mxu0 0.0
  %766 = vmatpush.msra.mxu0 0.0
  %767 = vmatpush.msra.mxu0 0.0
  %768 = vmatpush.msra.mxu0 0.0
  %769 = vmatpush.msra.mxu0 0.0
  %770 = vmatpush.msra.mxu0 0.0
  %771 = vmatpush.msra.mxu0 0.0
  %772 = vmatpush.msra.mxu0 %v691
  %773 = vmatmul.f32.gmra.mxu0 %v695
  %v774 = vpop.f32.mrf.mxu0
  %v775 = vadd.f32 0.0, %v774
  %776 = vdwg.mxu0
  %v778 = vsel %vm51, %v693, 0
  %780 = vmatpush.msra.mxu0 0.0
  %781 = vmatpush.msra.mxu0 0.0
  %782 = vmatpush.msra.mxu0 0.0
  %783 = vmatpush.msra.mxu0 0.0
  %784 = vmatpush.msra.mxu0 0.0
  %785 = vmatpush.msra.mxu0 0.0
  %786 = vmatpush.msra.mxu0 0.0
  %787 = vmatpush.msra.mxu0 0.0
  %788 = vmatpush.msra.mxu0 0.0
  %789 = vmatpush.msra.mxu0 0.0
  %790 = vmatpush.msra.mxu0 0.0
  %791 = vmatpush.msra.mxu0 0.0
  %792 = vmatpush.msra.mxu0 0.0
  %793 = vmatpush.msra.mxu0 0.0
  %794 = vmatpush.msra.mxu0 0.0
  %795 = vmatpush.msra.mxu0 %v715
  %796 = vmatmul.f32.gmra.mxu0 %v778
  %v797 = vpop.f32.mrf.mxu0
  %v798 = vadd.f32 0.0, %v797
  %799 = vdwg.mxu0
  %800 = vmatpush.msra.mxu0 0.0
  %801 = vmatpush.msra.mxu0 0.0
  %802 = vmatpush.msra.mxu0 0.0
  %803 = vmatpush.msra.mxu0 0.0
  %804 = vmatpush.msra.mxu0 0.0
  %805 = vmatpush.msra.mxu0 0.0
  %806 = vmatpush.msra.mxu0 0.0
  %807 = vmatpush.msra.mxu0 0.0
  %808 = vmatpush.msra.mxu0 0.0
  %809 = vmatpush.msra.mxu0 0.0
  %810 = vmatpush.msra.mxu0 0.0
  %811 = vmatpush.msra.mxu0 0.0
  %812 = vmatpush.msra.mxu0 0.0
  %813 = vmatpush.msra.mxu0 0.0
  %814 = vmatpush.msra.mxu0 0.0
  %815 = vmatpush.msra.mxu0 %v735
  %816 = vmatmul.f32.gmra.mxu0 %v778
  %v817 = vpop.f32.mrf.mxu0
  %v818 = vadd.f32 0.0, %v817
  %819 = vdwg.mxu0
  %820 = vmatpush.msra.mxu0 0.0
  %821 = vmatpush.msra.mxu0 0.0
  %822 = vmatpush.msra.mxu0 0.0
  %823 = vmatpush.msra.mxu0 0.0
  %824 = vmatpush.msra.mxu0 0.0
  %825 = vmatpush.msra.mxu0 0.0
  %826 = vmatpush.msra.mxu0 0.0
  %827 = vmatpush.msra.mxu0 0.0
  %828 = vmatpush.msra.mxu0 0.0
  %829 = vmatpush.msra.mxu0 0.0
  %830 = vmatpush.msra.mxu0 0.0
  %831 = vmatpush.msra.mxu0 0.0
  %832 = vmatpush.msra.mxu0 0.0
  %833 = vmatpush.msra.mxu0 0.0
  %834 = vmatpush.msra.mxu0 0.0
  %835 = vmatpush.msra.mxu0 %v755
  %836 = vmatmul.f32.gmra.mxu0 %v778
  %v837 = vpop.f32.mrf.mxu0
  %v838 = vadd.f32 0.0, %v837
  %839 = vdwg.mxu0
  %840 = vmatpush.msra.mxu0 0.0
  %841 = vmatpush.msra.mxu0 0.0
  %842 = vmatpush.msra.mxu0 0.0
  %843 = vmatpush.msra.mxu0 0.0
  %844 = vmatpush.msra.mxu0 0.0
  %845 = vmatpush.msra.mxu0 0.0
  %846 = vmatpush.msra.mxu0 0.0
  %847 = vmatpush.msra.mxu0 0.0
  %848 = vmatpush.msra.mxu0 0.0
  %849 = vmatpush.msra.mxu0 0.0
  %850 = vmatpush.msra.mxu0 0.0
  %851 = vmatpush.msra.mxu0 0.0
  %852 = vmatpush.msra.mxu0 0.0
  %853 = vmatpush.msra.mxu0 0.0
  %854 = vmatpush.msra.mxu0 0.0
  %855 = vmatpush.msra.mxu0 %v775
  %856 = vmatmul.f32.gmra.mxu0 %v778
  %v857 = vpop.f32.mrf.mxu0
  %v858 = vadd.f32 0.0, %v857
  %859 = vdwg.mxu0
  %v860 = vld [vmem:[%s11] sm:$0xff]
  %v861 = vld [vmem:[%s12] sm:$0xff]
  %v862 = vadd.f32 %v798, %v818
  %v863 = vadd.f32 %v862, %v838
  %v864 = vadd.f32 %v863, %v858
  %865 = vadd.xlane.f32.xlu0 %v864
  %v866 = vpop.xlane.xlu0 %865
  %v867 = vmul.f32 %v798, %v798
  %v868 = vmul.f32 %v818, %v818
  %v869 = vmul.f32 %v838, %v838
  %v870 = vmul.f32 %v858, %v858
  %v871 = vadd.f32 %v867, %v868
  %v872 = vadd.f32 %v871, %v869
  %v873 = vadd.f32 %v872, %v870
  %874 = vadd.xlane.f32.xlu0 %v873
  %v875 = vpop.xlane.xlu0 %874
  %v876 = vmul.f32 %v866, 0.001953125
  %v877 = vmul.f32 %v875, 0.001953125
  %v878 = vmul.f32 %v876, %v876
  %v879 = vsub.f32 %v877, %v878
  %v880 = vadd.f32 %v879, 1e-05
  %v881 = vrsqrt.pop %v880
  %v882 = vmul.f32 %v881, %v880
  %v883 = vmul.f32 %v882, %v881
  %v884 = vmul.f32 0.5, %v883
  %v885 = vsub.f32 1.5, %v884
  %v886 = vmul.f32 %v881, %v885
  %vm887 = vweird.f32 %v880
  %vm888 = vweird.f32 %v881
  %vm889 = vmor %vm887, %vm888
  %v890 = vsel %vm889, %v881, %v886
  %v891 = vmul.f32 %v860, %v890
  %v892 = vsub.f32 %v798, %v876
  %v893 = vsub.f32 %v818, %v876
  %v894 = vsub.f32 %v838, %v876
  %v895 = vsub.f32 %v858, %v876
  %897 = vset.pattern.permute.xlu0 0
  %898 = vperm.xlu0 %897, %v891
  %v899 = vpop.permute.xlu0 %898
  %v901 = vmul.f32 %v892, %v899
  %v902 = vmul.f32 %v893, %v899
  %v903 = vmul.f32 %v894, %v899
  %v904 = vmul.f32 %v895, %v899
  %906 = vset.pattern.permute.xlu0 0
  %907 = vperm.xlu0 %906, %v861
  %v908 = vpop.permute.xlu0 %907
  %v910 = vadd.f32 %v901, %v908
  %v911 = vadd.f32 %v902, %v908
  %v912 = vadd.f32 %v903, %v908
  %v913 = vadd.f32 %v904, %v908
  %v914 = vmax.f32 %v910, 0.0
  %v915 = vmax.f32 %v911, 0.0
  %v916 = vmax.f32 %v912, 0.0
  %v917 = vmax.f32 %v913, 0.0
  %918 = vst [vmem:[%s13] sm:$0xff] %v914
  %919 = vst [vmem:[%s13 + $0x8] sm:$0xff] %v915
  %920 = vst [vmem:[%s13 + $0x10] sm:$0xff] %v916
  %921 = vst [vmem:[%s13 + $0x18] sm:$0xff] %v917
  // Predicated region
  $region54: #{_lambda_.1} parent=0 // pred_check
    _
  $region55: #{_lambda_.1} parent=0 // pred_check_branch
    %923 = sbr.rel (0) target = $region57
  $region56: #{_lambda_.1} parent=0 // pred_region
    _
  $region57: #{_lambda_.1} parent=0 // pred_fallthru
    _
  // Predicated region
  $region58: #{_lambda_.1} parent=0 // pred_check
    _
  $region59: #{_lambda_.1} parent=0 // pred_check_branch
    %925 = sbr.rel (0) target = $region61
  $region60: #{_lambda_.1} parent=0 // pred_region
    _
  $region61: #{_lambda_.1} parent=0 // pred_fallthru
    _

</llo_original>
